<compile_context>
chip_gen: v7x
topology: tpu7x:2x2x1
jax: 0.10.0
libtpu: 0.0.40
codegen_flags: <defaults>
</compile_context>

<pallas_src>
import functools
import math

import jax
import jax.numpy as jnp
from jax.experimental import pallas as pl
from jax.experimental.pallas import tpu as pltpu

GAMMA = 2
ALPHA = 0.25
EPS = 1e-07
LOG_EPS = math.log(EPS)          # ~ -16.118; lower clamp for log(pt), log(1-pt)
X_CLAMP = 30.0                   # |x|>=30 already saturates beyond the eps clip;
                                 # also keeps exp() finite on tail-tile garbage.
TARGET_BLOCK_BYTES = 4096 * 128 * 4   # ~2 MiB of padded VMEM per input per buffer


def _focal_loss_kernel(x_ref, t_ref, out_ref, *, n_lead, block_n, tiles_per_core):
    c = pl.program_id(0)          # TensorCore-split axis (size 1 on 1-TC chips)
    i = pl.program_id(1)          # streaming/reduction axis ("arbitrary")

    @pl.when(i == 0)
    def _init():
        out_ref[...] = jnp.zeros_like(out_ref)

    x = x_ref[...].astype(jnp.float32)
    t = t_ref[...].astype(jnp.float32)

    # Numerically-stable focal loss (gamma=2), equivalent (to f32 rounding plus
    # <=1e-21-level clip-trim terms) to the torch reference:
    #   pt   = clip(sigmoid(x), eps, 1-eps)
    #   loss = -a*(1-pt)^2*t*log(pt) - (1-a)*pt^2*(1-t)*log(1-pt)
    # via log(sigmoid(x)) = -log(1+e^-x), log(1-sigmoid(x)) = -x - log(1+e^-x),
    # with the eps clip applied as a lower clamp in log-space.  (The torch
    # clamp(log, min=-100) is dead code given the eps clip.)
    xs = jnp.clip(x, -X_CLAMP, X_CLAMP)          # keeps exp finite even on garbage rows
    e = jnp.exp(-xs)
    one_plus_e = 1.0 + e
    l1pe = jnp.log(one_plus_e)                   # log(1 + e^-x) >= 0
    pt = pl.reciprocal(one_plus_e, approx=True)  # sigmoid(x); EUP, not a VALU divide
    log_pt = jnp.maximum(-l1pe, LOG_EPS)         # log(max(sigmoid(x), eps))
    log_1mpt = jnp.maximum(-xs - l1pe, LOG_EPS)  # log(max(1-sigmoid(x), eps))

    one_minus_pt = 1.0 - pt
    loss = (-ALPHA * (one_minus_pt * one_minus_pt) * t * log_pt
            - (1.0 - ALPHA) * (pt * pt) * (1.0 - t) * log_1mpt)

    # Global tile index / leading-row offset.  int32 is safe: it indexes leading
    # "image" slabs, not flat elements.
    g = c * tiles_per_core + i
    start = g * block_n

    @pl.when(start + block_n <= n_lead)
    def _full_tile():                  # interior tile: no masking work at all
        out_ref[...] += jnp.sum(loss, axis=0, keepdims=True)

    @pl.when(start + block_n > n_lead)
    def _tail_tile():                  # overlaps the ragged tail (or is a dummy tile)
        row = jax.lax.broadcasted_iota(jnp.int32, loss.shape, 0)
        # select (not arithmetic masking): NaN/Inf from uninitialized padding rows
        # cannot leak into the accumulator.
        masked = jnp.where(start + row < n_lead, loss, 0.0)
        out_ref[...] += jnp.sum(masked, axis=0, keepdims=True)


def _tensorcores_per_chip():
    # Only v7x-class chips have 2 TensorCores; on v5e/v6e a core split is pure
    # overhead (dummy remainder tile + extra init), so gate on the device kind.
    try:
        kind = jax.devices()[0].device_kind.lower()
    except Exception:
        return 1
    return 2 if ("v7" in kind or "7x" in kind) else 1


def bce_focal_loss(_input, target, reduction="elementwise_mean"):
    assert _input.shape == target.shape
    n_total = math.prod(_input.shape)

    if reduction == "elementwise_mean":
        scale = jnp.float32(1.0 / n_total) if n_total else jnp.float32(jnp.nan)
    elif reduction == "sum":
        scale = jnp.float32(1.0)
    else:
        # TODO(synk): reduction='none' (full elementwise output) not implemented here.
        raise NotImplementedError(f"reduction={reduction!r}")

    if n_total == 0:
        return jnp.float32(0.0) * scale   # nan for mean, 0 for sum (matches torch)

    # Collapse ONLY the leading dims -> (N, H, W).  The last two dims (which
    # define the (8,128)-tiled HBM layout) are untouched, so this reshape is
    # layout-free and no HBM->HBM relayout copy is emitted before the kernel.
    shape = _input.shape
    if _input.ndim >= 3:
        H, W = shape[-2], shape[-1]
    elif _input.ndim == 2:
        # TODO(synk): 2-D inputs are processed as a single untiled block (fine up
        # to a few MiB; tiling the sublane axis without a relayout is not done here).
        H, W = shape
    else:
        H, W = 1, max(n_total, 1)
    x3 = _input.reshape((-1, H, W))
    t3 = target.reshape((-1, H, W))
    N = x3.shape[0]

    # Block sizing: ~2 MiB of padded VMEM per input per buffer.  Padded slab
    # bytes per leading index account for the (sublane,128-lane) layout padding.
    itemsize = jnp.dtype(_input.dtype).itemsize
    sub = max(8, 32 // max(itemsize, 1))
    slab_bytes = (-(-H // sub) * sub) * (-(-W // 128) * 128) * itemsize
    block_n = max(1, min(N, TARGET_BLOCK_BYTES // slab_bytes))
    n_tiles = -(-N // block_n)

    n_cores = 2 if (_tensorcores_per_chip() >= 2 and n_tiles >= 2) else 1
    tiles_per_core = -(-n_tiles // n_cores)
    last_tile = n_tiles - 1

    def in_map(c, i):
        # Clamp keeps the (rare) remainder iteration of a 2-core split in bounds;
        # its contribution is zeroed by the in-kernel tail mask.
        return (jnp.minimum(c * tiles_per_core + i, last_tile), 0, 0)

    if n_cores == 2:
        # Plain "parallel" does not engage the second TensorCore; CORE_PARALLEL does.
        dim_sem = (getattr(pltpu, "CORE_PARALLEL", "parallel"), "arbitrary")
    else:
        dim_sem = ("arbitrary", "arbitrary")

    kernel = functools.partial(_focal_loss_kernel, n_lead=N, block_n=block_n,
                               tiles_per_core=tiles_per_core)

    partials = pl.pallas_call(
        kernel,
        out_shape=jax.ShapeDtypeStruct((n_cores, H, W), jnp.float32),
        grid_spec=pltpu.PrefetchScalarGridSpec(
            num_scalar_prefetch=0,
            grid=(n_cores, tiles_per_core),
            in_specs=[
                pl.BlockSpec((block_n, H, W), in_map),
                pl.BlockSpec((block_n, H, W), in_map),
            ],
            out_specs=pl.BlockSpec((1, H, W), lambda c, i: (c, 0, 0)),
        ),
        compiler_params=pltpu.CompilerParams(dimension_semantics=dim_sem),
    )(x3, t3)

    # Single cheap cross-sublane/lane (and cross-core) reduce + scale outside
    # the kernel; per-tile reductions above never touch the XLU.
    return jnp.sum(partials) * scale


def _reference(_input, target, reduction="elementwise_mean"):
    # Faithful transcription of the PyTorch module.
    pt = jax.nn.sigmoid(_input.astype(jnp.float32))
    pt = jnp.clip(pt, EPS, 1.0 - EPS)
    t = target.astype(jnp.float32)
    loss = (-ALPHA * (1.0 - pt) ** GAMMA * t * jnp.maximum(jnp.log(pt), -100.0)
            - (1.0 - ALPHA) * pt ** GAMMA * (1.0 - t)
            * jnp.maximum(jnp.log(1.0 - pt), -100.0))
    if reduction == "elementwise_mean":
        return jnp.mean(loss)
    if reduction == "sum":
        return jnp.sum(loss)
    return loss


if __name__ == "__main__":
    key = jax.random.PRNGKey(0)
    k1, k2 = jax.random.split(key)
    # NCHW-like logits and binary targets, small shapes.
    x = jax.random.normal(k1, (2, 4, 16, 16), dtype=jnp.float32) * 3.0
    y = (jax.random.uniform(k2, (2, 4, 16, 16)) > 0.5).astype(jnp.float32)

    loss = bce_focal_loss(x, y, reduction="elementwise_mean")
    loss = jax.block_until_ready(loss)

    ref = _reference(x, y, reduction="elementwise_mean")
    # rtol=1e-3: the kernel uses a cancellation-free log-sigmoid formulation and
    # an approx (EUP) reciprocal for pt, so it differs from the naive f32
    # reference only at the ~1e-4 relative level.
    assert jnp.allclose(loss, ref, rtol=1e-3, atol=1e-6), (loss, ref)
    print("KERNEL_OK")
</pallas_src>

<mosaic_0001>
module attributes {stable_mosaic.version = 11 : i64} {
  func.func @_focal_loss_kernel(%arg0: i32, %arg1: i32, %arg2: memref<8x16x16xf32, #tpu.memory_space<vmem>>, %arg3: memref<8x16x16xf32, #tpu.memory_space<vmem>>, %arg4: memref<1x16x16xf32, #tpu.memory_space<vmem>>) attributes {dimension_semantics = [#tpu.dimension_semantics<arbitrary>, #tpu.dimension_semantics<arbitrary>], iteration_bounds = array<i64: 1, 1>, scalar_prefetch = 0 : i64, scratch_operands = 0 : i64, tpu.core_type = #tpu.core_type<tc>, window_params = [{transform_indices = @transform_0, window_bounds = array<i64: 8, 16, 16>}, {transform_indices = @transform_1, window_bounds = array<i64: 8, 16, 16>}, {transform_indices = @transform_2, window_bounds = array<i64: 1, 16, 16>}]} {
    %c0_i32 = arith.constant 0 : i32
    %0 = arith.cmpi eq, %arg1, %c0_i32 : i32
    %1 = arith.extui %0 : i1 to i32
    %c0_i32_0 = arith.constant 0 : i32
    %2 = arith.cmpi ne, %1, %c0_i32_0 : i32
    scf.if %2 {
      %cst_23 = arith.constant 0.000000e+00 : f32
      %51 = vector.broadcast %cst_23 : f32 to vector<1x16x16xf32>
      %c0_24 = arith.constant 0 : index
      %c0_25 = arith.constant 0 : index
      %c0_26 = arith.constant 0 : index
      %52 = vector.load %arg4[%c0_24, %c0_25, %c0_26] : memref<1x16x16xf32, #tpu.memory_space<vmem>>, vector<1x16x16xf32>
      tpu.vector_store %arg4[%c0_24, %c0_25, %c0_26], %51 {strides = array<i32>} : memref<1x16x16xf32, #tpu.memory_space<vmem>>, vector<1x16x16xf32>,
    } else {
    }
    %c0 = arith.constant 0 : index
    %c0_1 = arith.constant 0 : index
    %c0_2 = arith.constant 0 : index
    %3 = vector.load %arg2[%c0, %c0_1, %c0_2] : memref<8x16x16xf32, #tpu.memory_space<vmem>>, vector<8x16x16xf32>
    %c0_3 = arith.constant 0 : index
    %c0_4 = arith.constant 0 : index
    %c0_5 = arith.constant 0 : index
    %4 = vector.load %arg3[%c0_3, %c0_4, %c0_5] : memref<8x16x16xf32, #tpu.memory_space<vmem>>, vector<8x16x16xf32>
    %cst = arith.constant -3.000000e+01 : f32
    %cst_6 = arith.constant 3.000000e+01 : f32
    %5 = vector.broadcast %cst : f32 to vector<8x16x16xf32>
    %6 = arith.maximumf %5, %3 : vector<8x16x16xf32>
    %7 = vector.broadcast %cst_6 : f32 to vector<8x16x16xf32>
    %8 = arith.minimumf %7, %6 : vector<8x16x16xf32>
    %cst_7 = arith.constant 0.000000e+00 : f32
    %9 = vector.broadcast %cst_7 : f32 to vector<8x16x16xf32>
    %10 = arith.subf %9, %8 : vector<8x16x16xf32>
    %11 = math.exp %10 : vector<8x16x16xf32>
    %cst_8 = arith.constant 1.000000e+00 : f32
    %12 = vector.broadcast %cst_8 : f32 to vector<8x16x16xf32>
    %13 = arith.addf %12, %11 : vector<8x16x16xf32>
    %14 = math.log %13 : vector<8x16x16xf32>
    %15 = tpu.reciprocal %13 {approx = true} : vector<8x16x16xf32> -> vector<8x16x16xf32>
    %cst_9 = arith.constant 0.000000e+00 : f32
    %16 = vector.broadcast %cst_9 : f32 to vector<8x16x16xf32>
    %17 = arith.subf %16, %14 : vector<8x16x16xf32>
    %cst_10 = arith.constant -16.1180954 : f32
    %18 = vector.broadcast %cst_10 : f32 to vector<8x16x16xf32>
    %19 = arith.maximumf %17, %18 : vector<8x16x16xf32>
    %cst_11 = arith.constant 0.000000e+00 : f32
    %20 = vector.broadcast %cst_11 : f32 to vector<8x16x16xf32>
    %21 = arith.subf %20, %8 : vector<8x16x16xf32>
    %22 = arith.subf %21, %14 : vector<8x16x16xf32>
    %cst_12 = arith.constant -16.1180954 : f32
    %23 = vector.broadcast %cst_12 : f32 to vector<8x16x16xf32>
    %24 = arith.maximumf %22, %23 : vector<8x16x16xf32>
    %cst_13 = arith.constant 1.000000e+00 : f32
    %25 = vector.broadcast %cst_13 : f32 to vector<8x16x16xf32>
    %26 = arith.subf %25, %15 : vector<8x16x16xf32>
    %27 = arith.mulf %26, %26 : vector<8x16x16xf32>
    %cst_14 = arith.constant -2.500000e-01 : f32
    %28 = vector.broadcast %cst_14 : f32 to vector<8x16x16xf32>
    %29 = arith.mulf %28, %27 : vector<8x16x16xf32>
    %30 = arith.mulf %29, %4 : vector<8x16x16xf32>
    %31 = arith.mulf %30, %19 : vector<8x16x16xf32>
    %32 = arith.mulf %15, %15 : vector<8x16x16xf32>
    %cst_15 = arith.constant 7.500000e-01 : f32
    %33 = vector.broadcast %cst_15 : f32 to vector<8x16x16xf32>
    %34 = arith.mulf %33, %32 : vector<8x16x16xf32>
    %cst_16 = arith.constant 1.000000e+00 : f32
    %35 = vector.broadcast %cst_16 : f32 to vector<8x16x16xf32>
    %36 = arith.subf %35, %4 : vector<8x16x16xf32>
    %37 = arith.mulf %34, %36 : vector<8x16x16xf32>
    %38 = arith.mulf %37, %24 : vector<8x16x16xf32>
    %39 = arith.subf %31, %38 : vector<8x16x16xf32>
    %c1_i32 = arith.constant 1 : i32
    %40 = arith.muli %arg0, %c1_i32 : i32
    %41 = arith.addi %40, %arg1 : i32
    %c8_i32 = arith.constant 8 : i32
    %42 = arith.muli %41, %c8_i32 : i32
    %c8_i32_17 = arith.constant 8 : i32
    %43 = arith.addi %42, %c8_i32_17 : i32
    %c8_i32_18 = arith.constant 8 : i32
    %44 = arith.cmpi sle, %43, %c8_i32_18 : i32
    %45 = arith.extui %44 : i1 to i32
    %c0_i32_19 = arith.constant 0 : i32
    %46 = arith.cmpi ne, %45, %c0_i32_19 : i32
    scf.if %46 {
      %c0_23 = arith.constant 0 : index
      %c0_24 = arith.constant 0 : index
      %c0_25 = arith.constant 0 : index
      %51 = vector.load %arg4[%c0_23, %c0_24, %c0_25] : memref<1x16x16xf32, #tpu.memory_space<vmem>>, vector<1x16x16xf32>
      %cst_26 = arith.constant dense<0.000000e+00> : vector<16x16xf32>
      %52 = vector.multi_reduction <add>, %39, %cst_26 [0] : vector<8x16x16xf32> to vector<16x16xf32>
      %53 = vector.shape_cast %52 : vector<16x16xf32> to vector<1x16x16xf32>
      %54 = arith.addf %51, %53 : vector<1x16x16xf32>
      %c0_27 = arith.constant 0 : index
      %c0_28 = arith.constant 0 : index
      %c0_29 = arith.constant 0 : index
      %55 = vector.load %arg4[%c0_27, %c0_28, %c0_29] : memref<1x16x16xf32, #tpu.memory_space<vmem>>, vector<1x16x16xf32>
      tpu.vector_store %arg4[%c0_27, %c0_28, %c0_29], %54 {strides = array<i32>} : memref<1x16x16xf32, #tpu.memory_space<vmem>>, vector<1x16x16xf32>,
    } else {
    }
    %c8_i32_20 = arith.constant 8 : i32
    %47 = arith.addi %42, %c8_i32_20 : i32
    %c8_i32_21 = arith.constant 8 : i32
    %48 = arith.cmpi sgt, %47, %c8_i32_21 : i32
    %49 = arith.extui %48 : i1 to i32
    %c0_i32_22 = arith.constant 0 : i32
    %50 = arith.cmpi ne, %49, %c0_i32_22 : i32
    scf.if %50 {
      %51 = tpu.iota {dimensions = array<i32: 0>} : vector<8x16x16xi32>
      %52 = vector.broadcast %42 : i32 to vector<8x16x16xi32>
      %53 = arith.addi %52, %51 : vector<8x16x16xi32>
      %c8_i32_23 = arith.constant 8 : i32
      %54 = vector.broadcast %c8_i32_23 : i32 to vector<8x16x16xi32>
      %55 = arith.cmpi slt, %53, %54 : vector<8x16x16xi32>
      %cst_24 = arith.constant 0.000000e+00 : f32
      %56 = vector.broadcast %cst_24 : f32 to vector<8x16x16xf32>
      %57 = arith.select %55, %39, %56 : vector<8x16x16xi1>, vector<8x16x16xf32>
      %c0_25 = arith.constant 0 : index
      %c0_26 = arith.constant 0 : index
      %c0_27 = arith.constant 0 : index
      %58 = vector.load %arg4[%c0_25, %c0_26, %c0_27] : memref<1x16x16xf32, #tpu.memory_space<vmem>>, vector<1x16x16xf32>
      %cst_28 = arith.constant dense<0.000000e+00> : vector<16x16xf32>
      %59 = vector.multi_reduction <add>, %57, %cst_28 [0] : vector<8x16x16xf32> to vector<16x16xf32>
      %60 = vector.shape_cast %59 : vector<16x16xf32> to vector<1x16x16xf32>
      %61 = arith.addf %58, %60 : vector<1x16x16xf32>
      %c0_29 = arith.constant 0 : index
      %c0_30 = arith.constant 0 : index
      %c0_31 = arith.constant 0 : index
      %62 = vector.load %arg4[%c0_29, %c0_30, %c0_31] : memref<1x16x16xf32, #tpu.memory_space<vmem>>, vector<1x16x16xf32>
      tpu.vector_store %arg4[%c0_29, %c0_30, %c0_31], %61 {strides = array<i32>} : memref<1x16x16xf32, #tpu.memory_space<vmem>>, vector<1x16x16xf32>,
    } else {
    }
    return
  }
  func.func @transform_0(%arg0: i32, %arg1: i32) -> (i32, i32, i32) {
    %c1_i32 = arith.constant 1 : i32
    %0 = arith.muli %arg0, %c1_i32 : i32
    %1 = arith.addi %0, %arg1 : i32
    %c0_i32 = arith.constant 0 : i32
    %2 = arith.minsi %1, %c0_i32 : i32
    %c0_i32_0 = arith.constant 0 : i32
    %c0_i32_1 = arith.constant 0 : i32
    %c0_i32_2 = arith.constant 0 : i32
    return %2, %c0_i32_0, %c0_i32_1 : i32, i32, i32
  }
  func.func @transform_1(%arg0: i32, %arg1: i32) -> (i32, i32, i32) {
    %c1_i32 = arith.constant 1 : i32
    %0 = arith.muli %arg0, %c1_i32 : i32
    %1 = arith.addi %0, %arg1 : i32
    %c0_i32 = arith.constant 0 : i32
    %2 = arith.minsi %1, %c0_i32 : i32
    %c0_i32_0 = arith.constant 0 : i32
    %c0_i32_1 = arith.constant 0 : i32
    %c0_i32_2 = arith.constant 0 : i32
    return %2, %c0_i32_0, %c0_i32_1 : i32, i32, i32
  }
  func.func @transform_2(%arg0: i32, %arg1: i32) -> (i32, i32, i32) {
    %c0_i32 = arith.constant 0 : i32
    %c0_i32_0 = arith.constant 0 : i32
    %c0_i32_1 = arith.constant 0 : i32
    return %arg0, %c0_i32, %c0_i32_0 : i32, i32, i32
  }
}

</mosaic_0001>

<llo_original>
// kernel: tpu_custom_call.1
$region0: #{tpu_custom_call.1}
  #allocation0 [shape = 'u32[]', space=smem, size = 0x4, offset = 0x4, fixed_abs, tag = 'smem constant byte address 0x4 - core index']
  #allocation1 [shape = 'u32[144,128]{1,0:T(1,128)}', space=vmem, size = 0x12000, scoped, tag = 'internal scratch']
  %s0 = inlined_call_operand.hbm [shape: f32[8,16,16], index: 0, kind: input, shape index: {}]
  %s1 = inlined_call_operand.hbm [shape: f32[8,16,16], index: 1, kind: input, shape index: {}]
  %s2 = inlined_call_operand.hbm [shape: f32[1,16,16], index: 2, kind: output, shape index: {}]
  %s3 = sld [smem:[#allocation0]]
  $region38: #{tpu_custom_call.1} parent=0
    _
  %s5 = ssub.s32 1, %s3
  %s6 = scalar_select 0, %s5, %s3
  $region1: #{tpu_custom_call.1} parent=0
    #allocation2 [shape = 'u8[65536]{0}', space=vmem, size = 0x10000, scoped, tag = 'input window, operand 0, single buffered']
    #allocation3 [shape = 's32[1]{0}', space=sflag, size = 0x4, scoped, tag = 'scoped memory for tpu_custom_call.1']
    #allocation4 [shape = 's32[1]{0}', space=sflag, size = 0x4, scoped, tag = 'scoped memory for tpu_custom_call.1']
    #allocation5 [shape = 'u8[65536]{0}', space=vmem, size = 0x10000, scoped, tag = 'input window, operand 1, single buffered']
    #allocation6 [shape = 's32[1]{0}', space=sflag, size = 0x4, scoped, tag = 'scoped memory for tpu_custom_call.1']
    #allocation7 [shape = 'u8[8192]{0}', space=vmem, size = 0x2000, scoped, tag = 'output window, operand 0, single buffered']
    %7 = vsyncpa [#allocation3], 0
    %8 = vsyncpa [#allocation6], 0
    %9 = vsyncpa [#allocation4], 0
    // Predicated region
    $region2: #{tpu_custom_call.1} parent=1 // pred_check
      _
    $region3: #{tpu_custom_call.1} parent=1 // pred_check_branch
      %11 = sbr.rel (0) target = $region5
    $region4: #{tpu_custom_call.1} parent=1 // pred_region
      %s12 = sadd.s32 0, 0
      %p13 = scmp.lt.s32.totalorder %s12, 0
      %s14 = scalar_select %p13, %s12, 0
      %s15 = smul.u32 8, %s14
      %s17 = ssub.s32 2048, 2048
      %18 = vsyncadd [#allocation3], %s17
      %s19 = smul.addr %s15, 2
      %s20 = smul.addr %s19, 128
      %s21 = scalar_lea.hbm %s0, %s20
      %s22 = sshll.u32 [#allocation2], 4
      %s23 = int_to_ptr.vmem [resolvable:$true] %s22
      %28 = dma.hbm_to_vmem [thread:$0]  %s21, 2048, %s23, [#allocation3], 128, 128, 8
    $region5: #{tpu_custom_call.1} parent=1 // pred_fallthru
      _
    // Predicated region
    $region6: #{tpu_custom_call.1} parent=1 // pred_check
      _
    $region7: #{tpu_custom_call.1} parent=1 // pred_check_branch
      %30 = sbr.rel (0) target = $region9
    $region8: #{tpu_custom_call.1} parent=1 // pred_region
      %s31 = sadd.s32 0, 0
      %p32 = scmp.lt.s32.totalorder %s31, 0
      %s33 = scalar_select %p32, %s31, 0
      %s34 = smul.u32 8, %s33
      %s36 = ssub.s32 2048, 2048
      %37 = vsyncadd [#allocation6], %s36
      %s38 = smul.addr %s34, 2
      %s39 = smul.addr %s38, 128
      %s40 = scalar_lea.hbm %s1, %s39
      %s41 = sshll.u32 [#allocation5], 4
      %s42 = int_to_ptr.vmem [resolvable:$true] %s41
      %47 = dma.hbm_to_vmem [thread:$0]  %s40, 2048, %s42, [#allocation6], 128, 128, 8
    $region9: #{tpu_custom_call.1} parent=1 // pred_fallthru
      _
    // Predicated region
    $region10: #{tpu_custom_call.1} parent=1 // pred_check
      _
    $region11: #{tpu_custom_call.1} parent=1 // pred_check_branch
      %49 = sbr.rel (0) target = $region13
    $region12: #{tpu_custom_call.1} parent=1 // pred_region
      %50 = dma.done [#allocation3], 2048
    $region13: #{tpu_custom_call.1} parent=1 // pred_fallthru
      _
    // Predicated region
    $region14: #{tpu_custom_call.1} parent=1 // pred_check
      _
    $region15: #{tpu_custom_call.1} parent=1 // pred_check_branch
      %52 = sbr.rel (0) target = $region17
    $region16: #{tpu_custom_call.1} parent=1 // pred_region
      %53 = dma.done [#allocation6], 2048
    $region17: #{tpu_custom_call.1} parent=1 // pred_fallthru
      _
    %s54 = sadd.s32 0, 0
    %p55 = scmp.lt.s32.totalorder %s54, 0
    %s56 = scalar_select %p55, %s54, 0
    %s57 = smul.u32 8, %s56
    %s58 = sadd.s32 0, 0
    %p59 = scmp.lt.s32.totalorder %s58, 0
    %s60 = scalar_select %p59, %s58, 0
    %s61 = smul.u32 8, %s60
    %p62 = scmp.eq.s32.totalorder 0, 0
    // Predicated region
    $region18: #{tpu_custom_call.1} parent=1 // pred_check
      %p63 = pneg %p62
    $region19: #{tpu_custom_call.1} parent=1 // pred_check_branch
      %65 = sbr.rel (%p63) target = $region21
    $region20: #{tpu_custom_call.1} parent=1 // pred_region
      %vm66 = vcmask 130048
      %67 = vst.msk [vmem:[#allocation7] sm:$0xff] %vm66, 0.0
      %68 = vst.msk [vmem:[#allocation7 + $0x8] sm:$0xff] %vm66, 0.0
    $region21: #{tpu_custom_call.1} parent=1 // pred_fallthru
      _
    %v69 = vld [vmem:[#allocation2] sm:$0xff]
    %v70 = vld [vmem:[#allocation2 + $0x8] sm:$0xff]
    %v71 = vld [vmem:[#allocation2 + $0x10] sm:$0xff]
    %v72 = vld [vmem:[#allocation2 + $0x18] sm:$0xff]
    %v73 = vld [vmem:[#allocation2 + $0x20] sm:$0xff]
    %v74 = vld [vmem:[#allocation2 + $0x28] sm:$0xff]
    %v75 = vld [vmem:[#allocation2 + $0x30] sm:$0xff]
    %v76 = vld [vmem:[#allocation2 + $0x38] sm:$0xff]
    %v77 = vld [vmem:[#allocation2 + $0x40] sm:$0xff]
    %v78 = vld [vmem:[#allocation2 + $0x48] sm:$0xff]
    %v79 = vld [vmem:[#allocation2 + $0x50] sm:$0xff]
    %v80 = vld [vmem:[#allocation2 + $0x58] sm:$0xff]
    %v81 = vld [vmem:[#allocation2 + $0x60] sm:$0xff]
    %v82 = vld [vmem:[#allocation2 + $0x68] sm:$0xff]
    %v83 = vld [vmem:[#allocation2 + $0x70] sm:$0xff]
    %v84 = vld [vmem:[#allocation2 + $0x78] sm:$0xff]
    %v85 = vld [vmem:[#allocation5] sm:$0xff]
    %v86 = vld [vmem:[#allocation5 + $0x8] sm:$0xff]
    %v87 = vld [vmem:[#allocation5 + $0x10] sm:$0xff]
    %v88 = vld [vmem:[#allocation5 + $0x18] sm:$0xff]
    %v89 = vld [vmem:[#allocation5 + $0x20] sm:$0xff]
    %v90 = vld [vmem:[#allocation5 + $0x28] sm:$0xff]
    %v91 = vld [vmem:[#allocation5 + $0x30] sm:$0xff]
    %v92 = vld [vmem:[#allocation5 + $0x38] sm:$0xff]
    %v93 = vld [vmem:[#allocation5 + $0x40] sm:$0xff]
    %v94 = vld [vmem:[#allocation5 + $0x48] sm:$0xff]
    %v95 = vld [vmem:[#allocation5 + $0x50] sm:$0xff]
    %v96 = vld [vmem:[#allocation5 + $0x58] sm:$0xff]
    %v97 = vld [vmem:[#allocation5 + $0x60] sm:$0xff]
    %v98 = vld [vmem:[#allocation5 + $0x68] sm:$0xff]
    %v99 = vld [vmem:[#allocation5 + $0x70] sm:$0xff]
    %v100 = vld [vmem:[#allocation5 + $0x78] sm:$0xff]
    %v101 = vmax.f32 %v69, -30.0
    %v102 = vmax.f32 %v70, -30.0
    %v103 = vmax.f32 %v71, -30.0
    %v104 = vmax.f32 %v72, -30.0
    %v105 = vmax.f32 %v73, -30.0
    %v106 = vmax.f32 %v74, -30.0
    %v107 = vmax.f32 %v75, -30.0
    %v108 = vmax.f32 %v76, -30.0
    %v109 = vmax.f32 %v77, -30.0
    %v110 = vmax.f32 %v78, -30.0
    %v111 = vmax.f32 %v79, -30.0
    %v112 = vmax.f32 %v80, -30.0
    %v113 = vmax.f32 %v81, -30.0
    %v114 = vmax.f32 %v82, -30.0
    %v115 = vmax.f32 %v83, -30.0
    %v116 = vmax.f32 %v84, -30.0
    %v117 = vmin.f32 %v101, 30.0
    %v118 = vmin.f32 %v102, 30.0
    %v119 = vmin.f32 %v103, 30.0
    %v120 = vmin.f32 %v104, 30.0
    %v121 = vmin.f32 %v105, 30.0
    %v122 = vmin.f32 %v106, 30.0
    %v123 = vmin.f32 %v107, 30.0
    %v124 = vmin.f32 %v108, 30.0
    %v125 = vmin.f32 %v109, 30.0
    %v126 = vmin.f32 %v110, 30.0
    %v127 = vmin.f32 %v111, 30.0
    %v128 = vmin.f32 %v112, 30.0
    %v129 = vmin.f32 %v113, 30.0
    %v130 = vmin.f32 %v114, 30.0
    %v131 = vmin.f32 %v115, 30.0
    %v132 = vmin.f32 %v116, 30.0
    %v133 = vsub.f32 0.0, %v117
    %v134 = vsub.f32 0.0, %v118
    %v135 = vsub.f32 0.0, %v119
    %v136 = vsub.f32 0.0, %v120
    %v137 = vsub.f32 0.0, %v121
    %v138 = vsub.f32 0.0, %v122
    %v139 = vsub.f32 0.0, %v123
    %v140 = vsub.f32 0.0, %v124
    %v141 = vsub.f32 0.0, %v125
    %v142 = vsub.f32 0.0, %v126
    %v143 = vsub.f32 0.0, %v127
    %v144 = vsub.f32 0.0, %v128
    %v145 = vsub.f32 0.0, %v129
    %v146 = vsub.f32 0.0, %v130
    %v147 = vsub.f32 0.0, %v131
    %v148 = vsub.f32 0.0, %v132
    %v149 = vmul.f32 %v133, 1.442695
    %v150 = vpow.pop %v149
    %v151 = vmul.f32 %v134, 1.442695
    %v152 = vpow.pop %v151
    %v153 = vmul.f32 %v135, 1.442695
    %v154 = vpow.pop %v153
    %v155 = vmul.f32 %v136, 1.442695
    %v156 = vpow.pop %v155
    %v157 = vmul.f32 %v137, 1.442695
    %v158 = vpow.pop %v157
    %v159 = vmul.f32 %v138, 1.442695
    %v160 = vpow.pop %v159
    %v161 = vmul.f32 %v139, 1.442695
    %v162 = vpow.pop %v161
    %v163 = vmul.f32 %v140, 1.442695
    %v164 = vpow.pop %v163
    %v165 = vmul.f32 %v141, 1.442695
    %v166 = vpow.pop %v165
    %v167 = vmul.f32 %v142, 1.442695
    %v168 = vpow.pop %v167
    %v169 = vmul.f32 %v143, 1.442695
    %v170 = vpow.pop %v169
    %v171 = vmul.f32 %v144, 1.442695
    %v172 = vpow.pop %v171
    %v173 = vmul.f32 %v145, 1.442695
    %v174 = vpow.pop %v173
    %v175 = vmul.f32 %v146, 1.442695
    %v176 = vpow.pop %v175
    %v177 = vmul.f32 %v147, 1.442695
    %v178 = vpow.pop %v177
    %v179 = vmul.f32 %v148, 1.442695
    %v180 = vpow.pop %v179
    %v181 = vadd.f32 %v150, 1.0
    %v182 = vadd.f32 %v152, 1.0
    %v183 = vadd.f32 %v154, 1.0
    %v184 = vadd.f32 %v156, 1.0
    %v185 = vadd.f32 %v158, 1.0
    %v186 = vadd.f32 %v160, 1.0
    %v187 = vadd.f32 %v162, 1.0
    %v188 = vadd.f32 %v164, 1.0
    %v189 = vadd.f32 %v166, 1.0
    %v190 = vadd.f32 %v168, 1.0
    %v191 = vadd.f32 %v170, 1.0
    %v192 = vadd.f32 %v172, 1.0
    %v193 = vadd.f32 %v174, 1.0
    %v194 = vadd.f32 %v176, 1.0
    %v195 = vadd.f32 %v178, 1.0
    %v196 = vadd.f32 %v180, 1.0
    %v197 = vlog2.pop %v181
    %v198 = vmul.f32 %v197, 0.6931472
    %v199 = vlog2.pop %v182
    %v200 = vmul.f32 %v199, 0.6931472
    %v201 = vlog2.pop %v183
    %v202 = vmul.f32 %v201, 0.6931472
    %v203 = vlog2.pop %v184
    %v204 = vmul.f32 %v203, 0.6931472
    %v205 = vlog2.pop %v185
    %v206 = vmul.f32 %v205, 0.6931472
    %v207 = vlog2.pop %v186
    %v208 = vmul.f32 %v207, 0.6931472
    %v209 = vlog2.pop %v187
    %v210 = vmul.f32 %v209, 0.6931472
    %v211 = vlog2.pop %v188
    %v212 = vmul.f32 %v211, 0.6931472
    %v213 = vlog2.pop %v189
    %v214 = vmul.f32 %v213, 0.6931472
    %v215 = vlog2.pop %v190
    %v216 = vmul.f32 %v215, 0.6931472
    %v217 = vlog2.pop %v191
    %v218 = vmul.f32 %v217, 0.6931472
    %v219 = vlog2.pop %v192
    %v220 = vmul.f32 %v219, 0.6931472
    %v221 = vlog2.pop %v193
    %v222 = vmul.f32 %v221, 0.6931472
    %v223 = vlog2.pop %v194
    %v224 = vmul.f32 %v223, 0.6931472
    %v225 = vlog2.pop %v195
    %v226 = vmul.f32 %v225, 0.6931472
    %v227 = vlog2.pop %v196
    %v228 = vmul.f32 %v227, 0.6931472
    %v229 = vrcp.pop %v181
    %v230 = vrcp.pop %v182
    %v231 = vrcp.pop %v183
    %v232 = vrcp.pop %v184
    %v233 = vrcp.pop %v185
    %v234 = vrcp.pop %v186
    %v235 = vrcp.pop %v187
    %v236 = vrcp.pop %v188
    %v237 = vrcp.pop %v189
    %v238 = vrcp.pop %v190
    %v239 = vrcp.pop %v191
    %v240 = vrcp.pop %v192
    %v241 = vrcp.pop %v193
    %v242 = vrcp.pop %v194
    %v243 = vrcp.pop %v195
    %v244 = vrcp.pop %v196
    %v245 = vsub.f32 0.0, %v198
    %v246 = vsub.f32 0.0, %v200
    %v247 = vsub.f32 0.0, %v202
    %v248 = vsub.f32 0.0, %v204
    %v249 = vsub.f32 0.0, %v206
    %v250 = vsub.f32 0.0, %v208
    %v251 = vsub.f32 0.0, %v210
    %v252 = vsub.f32 0.0, %v212
    %v253 = vsub.f32 0.0, %v214
    %v254 = vsub.f32 0.0, %v216
    %v255 = vsub.f32 0.0, %v218
    %v256 = vsub.f32 0.0, %v220
    %v257 = vsub.f32 0.0, %v222
    %v258 = vsub.f32 0.0, %v224
    %v259 = vsub.f32 0.0, %v226
    %v260 = vsub.f32 0.0, %v228
    %v261 = vmax.f32 %v245, -16.118095
    %v262 = vmax.f32 %v246, -16.118095
    %v263 = vmax.f32 %v247, -16.118095
    %v264 = vmax.f32 %v248, -16.118095
    %v265 = vmax.f32 %v249, -16.118095
    %v266 = vmax.f32 %v250, -16.118095
    %v267 = vmax.f32 %v251, -16.118095
    %v268 = vmax.f32 %v252, -16.118095
    %v269 = vmax.f32 %v253, -16.118095
    %v270 = vmax.f32 %v254, -16.118095
    %v271 = vmax.f32 %v255, -16.118095
    %v272 = vmax.f32 %v256, -16.118095
    %v273 = vmax.f32 %v257, -16.118095
    %v274 = vmax.f32 %v258, -16.118095
    %v275 = vmax.f32 %v259, -16.118095
    %v276 = vmax.f32 %v260, -16.118095
    %v277 = vsub.f32 %v133, %v198
    %v278 = vsub.f32 %v134, %v200
    %v279 = vsub.f32 %v135, %v202
    %v280 = vsub.f32 %v136, %v204
    %v281 = vsub.f32 %v137, %v206
    %v282 = vsub.f32 %v138, %v208
    %v283 = vsub.f32 %v139, %v210
    %v284 = vsub.f32 %v140, %v212
    %v285 = vsub.f32 %v141, %v214
    %v286 = vsub.f32 %v142, %v216
    %v287 = vsub.f32 %v143, %v218
    %v288 = vsub.f32 %v144, %v220
    %v289 = vsub.f32 %v145, %v222
    %v290 = vsub.f32 %v146, %v224
    %v291 = vsub.f32 %v147, %v226
    %v292 = vsub.f32 %v148, %v228
    %v293 = vmax.f32 %v277, -16.118095
    %v294 = vmax.f32 %v278, -16.118095
    %v295 = vmax.f32 %v279, -16.118095
    %v296 = vmax.f32 %v280, -16.118095
    %v297 = vmax.f32 %v281, -16.118095
    %v298 = vmax.f32 %v282, -16.118095
    %v299 = vmax.f32 %v283, -16.118095
    %v300 = vmax.f32 %v284, -16.118095
    %v301 = vmax.f32 %v285, -16.118095
    %v302 = vmax.f32 %v286, -16.118095
    %v303 = vmax.f32 %v287, -16.118095
    %v304 = vmax.f32 %v288, -16.118095
    %v305 = vmax.f32 %v289, -16.118095
    %v306 = vmax.f32 %v290, -16.118095
    %v307 = vmax.f32 %v291, -16.118095
    %v308 = vmax.f32 %v292, -16.118095
    %v309 = vsub.f32 1.0, %v229
    %v310 = vsub.f32 1.0, %v230
    %v311 = vsub.f32 1.0, %v231
    %v312 = vsub.f32 1.0, %v232
    %v313 = vsub.f32 1.0, %v233
    %v314 = vsub.f32 1.0, %v234
    %v315 = vsub.f32 1.0, %v235
    %v316 = vsub.f32 1.0, %v236
    %v317 = vsub.f32 1.0, %v237
    %v318 = vsub.f32 1.0, %v238
    %v319 = vsub.f32 1.0, %v239
    %v320 = vsub.f32 1.0, %v240
    %v321 = vsub.f32 1.0, %v241
    %v322 = vsub.f32 1.0, %v242
    %v323 = vsub.f32 1.0, %v243
    %v324 = vsub.f32 1.0, %v244
    %v325 = vmul.f32 %v309, %v309
    %v326 = vmul.f32 %v310, %v310
    %v327 = vmul.f32 %v311, %v311
    %v328 = vmul.f32 %v312, %v312
    %v329 = vmul.f32 %v313, %v313
    %v330 = vmul.f32 %v314, %v314
    %v331 = vmul.f32 %v315, %v315
    %v332 = vmul.f32 %v316, %v316
    %v333 = vmul.f32 %v317, %v317
    %v334 = vmul.f32 %v318, %v318
    %v335 = vmul.f32 %v319, %v319
    %v336 = vmul.f32 %v320, %v320
    %v337 = vmul.f32 %v321, %v321
    %v338 = vmul.f32 %v322, %v322
    %v339 = vmul.f32 %v323, %v323
    %v340 = vmul.f32 %v324, %v324
    %v341 = vmul.f32 %v325, -0.25
    %v342 = vmul.f32 %v326, -0.25
    %v343 = vmul.f32 %v327, -0.25
    %v344 = vmul.f32 %v328, -0.25
    %v345 = vmul.f32 %v329, -0.25
    %v346 = vmul.f32 %v330, -0.25
    %v347 = vmul.f32 %v331, -0.25
    %v348 = vmul.f32 %v332, -0.25
    %v349 = vmul.f32 %v333, -0.25
    %v350 = vmul.f32 %v334, -0.25
    %v351 = vmul.f32 %v335, -0.25
    %v352 = vmul.f32 %v336, -0.25
    %v353 = vmul.f32 %v337, -0.25
    %v354 = vmul.f32 %v338, -0.25
    %v355 = vmul.f32 %v339, -0.25
    %v356 = vmul.f32 %v340, -0.25
    %v357 = vmul.f32 %v341, %v85
    %v358 = vmul.f32 %v342, %v86
    %v359 = vmul.f32 %v343, %v87
    %v360 = vmul.f32 %v344, %v88
    %v361 = vmul.f32 %v345, %v89
    %v362 = vmul.f32 %v346, %v90
    %v363 = vmul.f32 %v347, %v91
    %v364 = vmul.f32 %v348, %v92
    %v365 = vmul.f32 %v349, %v93
    %v366 = vmul.f32 %v350, %v94
    %v367 = vmul.f32 %v351, %v95
    %v368 = vmul.f32 %v352, %v96
    %v369 = vmul.f32 %v353, %v97
    %v370 = vmul.f32 %v354, %v98
    %v371 = vmul.f32 %v355, %v99
    %v372 = vmul.f32 %v356, %v100
    %v373 = vmul.f32 %v357, %v261
    %v374 = vmul.f32 %v358, %v262
    %v375 = vmul.f32 %v359, %v263
    %v376 = vmul.f32 %v360, %v264
    %v377 = vmul.f32 %v361, %v265
    %v378 = vmul.f32 %v362, %v266
    %v379 = vmul.f32 %v363, %v267
    %v380 = vmul.f32 %v364, %v268
    %v381 = vmul.f32 %v365, %v269
    %v382 = vmul.f32 %v366, %v270
    %v383 = vmul.f32 %v367, %v271
    %v384 = vmul.f32 %v368, %v272
    %v385 = vmul.f32 %v369, %v273
    %v386 = vmul.f32 %v370, %v274
    %v387 = vmul.f32 %v371, %v275
    %v388 = vmul.f32 %v372, %v276
    %v389 = vmul.f32 %v229, %v229
    %v390 = vmul.f32 %v230, %v230
    %v391 = vmul.f32 %v231, %v231
    %v392 = vmul.f32 %v232, %v232
    %v393 = vmul.f32 %v233, %v233
    %v394 = vmul.f32 %v234, %v234
    %v395 = vmul.f32 %v235, %v235
    %v396 = vmul.f32 %v236, %v236
    %v397 = vmul.f32 %v237, %v237
    %v398 = vmul.f32 %v238, %v238
    %v399 = vmul.f32 %v239, %v239
    %v400 = vmul.f32 %v240, %v240
    %v401 = vmul.f32 %v241, %v241
    %v402 = vmul.f32 %v242, %v242
    %v403 = vmul.f32 %v243, %v243
    %v404 = vmul.f32 %v244, %v244
    %v405 = vmul.f32 %v389, 0.75
    %v406 = vmul.f32 %v390, 0.75
    %v407 = vmul.f32 %v391, 0.75
    %v408 = vmul.f32 %v392, 0.75
    %v409 = vmul.f32 %v393, 0.75
    %v410 = vmul.f32 %v394, 0.75
    %v411 = vmul.f32 %v395, 0.75
    %v412 = vmul.f32 %v396, 0.75
    %v413 = vmul.f32 %v397, 0.75
    %v414 = vmul.f32 %v398, 0.75
    %v415 = vmul.f32 %v399, 0.75
    %v416 = vmul.f32 %v400, 0.75
    %v417 = vmul.f32 %v401, 0.75
    %v418 = vmul.f32 %v402, 0.75
    %v419 = vmul.f32 %v403, 0.75
    %v420 = vmul.f32 %v404, 0.75
    %v421 = vsub.f32 1.0, %v85
    %v422 = vsub.f32 1.0, %v86
    %v423 = vsub.f32 1.0, %v87
    %v424 = vsub.f32 1.0, %v88
    %v425 = vsub.f32 1.0, %v89
    %v426 = vsub.f32 1.0, %v90
    %v427 = vsub.f32 1.0, %v91
    %v428 = vsub.f32 1.0, %v92
    %v429 = vsub.f32 1.0, %v93
    %v430 = vsub.f32 1.0, %v94
    %v431 = vsub.f32 1.0, %v95
    %v432 = vsub.f32 1.0, %v96
    %v433 = vsub.f32 1.0, %v97
    %v434 = vsub.f32 1.0, %v98
    %v435 = vsub.f32 1.0, %v99
    %v436 = vsub.f32 1.0, %v100
    %v437 = vmul.f32 %v405, %v421
    %v438 = vmul.f32 %v406, %v422
    %v439 = vmul.f32 %v407, %v423
    %v440 = vmul.f32 %v408, %v424
    %v441 = vmul.f32 %v409, %v425
    %v442 = vmul.f32 %v410, %v426
    %v443 = vmul.f32 %v411, %v427
    %v444 = vmul.f32 %v412, %v428
    %v445 = vmul.f32 %v413, %v429
    %v446 = vmul.f32 %v414, %v430
    %v447 = vmul.f32 %v415, %v431
    %v448 = vmul.f32 %v416, %v432
    %v449 = vmul.f32 %v417, %v433
    %v450 = vmul.f32 %v418, %v434
    %v451 = vmul.f32 %v419, %v435
    %v452 = vmul.f32 %v420, %v436
    %v453 = vmul.f32 %v437, %v293
    %v454 = vmul.f32 %v438, %v294
    %v455 = vmul.f32 %v439, %v295
    %v456 = vmul.f32 %v440, %v296
    %v457 = vmul.f32 %v441, %v297
    %v458 = vmul.f32 %v442, %v298
    %v459 = vmul.f32 %v443, %v299
    %v460 = vmul.f32 %v444, %v300
    %v461 = vmul.f32 %v445, %v301
    %v462 = vmul.f32 %v446, %v302
    %v463 = vmul.f32 %v447, %v303
    %v464 = vmul.f32 %v448, %v304
    %v465 = vmul.f32 %v449, %v305
    %v466 = vmul.f32 %v450, %v306
    %v467 = vmul.f32 %v451, %v307
    %v468 = vmul.f32 %v452, %v308
    %v469 = vsub.f32 %v373, %v453
    %v470 = vsub.f32 %v374, %v454
    %v471 = vsub.f32 %v375, %v455
    %v472 = vsub.f32 %v376, %v456
    %v473 = vsub.f32 %v377, %v457
    %v474 = vsub.f32 %v378, %v458
    %v475 = vsub.f32 %v379, %v459
    %v476 = vsub.f32 %v380, %v460
    %v477 = vsub.f32 %v381, %v461
    %v478 = vsub.f32 %v382, %v462
    %v479 = vsub.f32 %v383, %v463
    %v480 = vsub.f32 %v384, %v464
    %v481 = vsub.f32 %v385, %v465
    %v482 = vsub.f32 %v386, %v466
    %v483 = vsub.f32 %v387, %v467
    %v484 = vsub.f32 %v388, %v468
    %s485 = sadd.s32 0, 0
    %s486 = smul.u32 %s485, 8
    %s487 = sadd.s32 %s486, 8
    %p488 = scmp.le.s32.totalorder %s487, 8
    // Predicated region
    $region22: #{tpu_custom_call.1} parent=1 // pred_check
      %p489 = pneg %p488
    $region23: #{tpu_custom_call.1} parent=1 // pred_check_branch
      %491 = sbr.rel (%p489) target = $region25
    $region24: #{tpu_custom_call.1} parent=1 // pred_region
      %v492 = vld [vmem:[#allocation7] sm:$0xff]
      %v493 = vld [vmem:[#allocation7 + $0x8] sm:$0xff]
      %vm494 = vcmask 130048
      %v495 = vsel %vm494, %v469, 0.0
      %v496 = vsel %vm494, %v471, 0.0
      %v497 = vadd.f32 %v495, %v496
      %v498 = vsel %vm494, %v473, 0.0
      %v499 = vadd.f32 %v497, %v498
      %v500 = vsel %vm494, %v475, 0.0
      %v501 = vadd.f32 %v499, %v500
      %v502 = vsel %vm494, %v477, 0.0
      %v503 = vadd.f32 %v501, %v502
      %v504 = vsel %vm494, %v479, 0.0
      %v505 = vadd.f32 %v503, %v504
      %v506 = vsel %vm494, %v481, 0.0
      %v507 = vadd.f32 %v505, %v506
      %v508 = vsel %vm494, %v483, 0.0
      %v509 = vadd.f32 %v507, %v508
      %v510 = vsel %vm494, %v470, 0.0
      %v511 = vsel %vm494, %v472, 0.0
      %v512 = vadd.f32 %v510, %v511
      %v513 = vsel %vm494, %v474, 0.0
      %v514 = vadd.f32 %v512, %v513
      %v515 = vsel %vm494, %v476, 0.0
      %v516 = vadd.f32 %v514, %v515
      %v517 = vsel %vm494, %v478, 0.0
      %v518 = vadd.f32 %v516, %v517
      %v519 = vsel %vm494, %v480, 0.0
      %v520 = vadd.f32 %v518, %v519
      %v521 = vsel %vm494, %v482, 0.0
      %v522 = vadd.f32 %v520, %v521
      %v523 = vsel %vm494, %v484, 0.0
      %v524 = vadd.f32 %v522, %v523
      %v525 = vadd.f32 %v492, %v509
      %v526 = vadd.f32 %v493, %v524
      %527 = vst.msk [vmem:[#allocation7] sm:$0xff] %vm494, %v525
      %528 = vst.msk [vmem:[#allocation7 + $0x8] sm:$0xff] %vm494, %v526
    $region25: #{tpu_custom_call.1} parent=1 // pred_fallthru
      _
    %p529 = scmp.gt.s32.totalorder %s487, 8
    // Predicated region
    $region26: #{tpu_custom_call.1} parent=1 // pred_check
      %p530 = pneg %p529
    $region27: #{tpu_custom_call.1} parent=1 // pred_check_branch
      %532 = sbr.rel (%p530) target = $region29
    $region28: #{tpu_custom_call.1} parent=1 // pred_region
      %v533 = vstv %s486
      %v534 = vadd.s32 %v533, 1
      %v535 = vadd.s32 %v533, 2
      %v536 = vadd.s32 %v533, 3
      %v537 = vadd.s32 %v533, 4
      %v538 = vadd.s32 %v533, 5
      %v539 = vadd.s32 %v533, 6
      %v540 = vadd.s32 %v533, 7
      %vm541 = vcmp.lt.s32.totalorder %v533, 8
      %vm542 = vcmp.lt.s32.totalorder %v534, 8
      %vm543 = vcmp.lt.s32.totalorder %v535, 8
      %vm544 = vcmp.lt.s32.totalorder %v536, 8
      %vm545 = vcmp.lt.s32.totalorder %v537, 8
      %vm546 = vcmp.lt.s32.totalorder %v538, 8
      %vm547 = vcmp.lt.s32.totalorder %v539, 8
      %vm548 = vcmp.lt.s32.totalorder %v540, 8
      %v549 = vsel %vm541, %v469, 0.0
      %v550 = vsel %vm541, %v470, 0.0
      %v551 = vsel %vm542, %v471, 0.0
      %v552 = vsel %vm542, %v472, 0.0
      %v553 = vsel %vm543, %v473, 0.0
      %v554 = vsel %vm543, %v474, 0.0
      %v555 = vsel %vm544, %v475, 0.0
      %v556 = vsel %vm544, %v476, 0.0
      %v557 = vsel %vm545, %v477, 0.0
      %v558 = vsel %vm545, %v478, 0.0
      %v559 = vsel %vm546, %v479, 0.0
      %v560 = vsel %vm546, %v480, 0.0
      %v561 = vsel %vm547, %v481, 0.0
      %v562 = vsel %vm547, %v482, 0.0
      %v563 = vsel %vm548, %v483, 0.0
      %v564 = vsel %vm548, %v484, 0.0
      %v565 = vld [vmem:[#allocation7] sm:$0xff]
      %v566 = vld [vmem:[#allocation7 + $0x8] sm:$0xff]
      %vm567 = vcmask 130048
      %v568 = vsel %vm567, %v549, 0.0
      %v569 = vsel %vm567, %v551, 0.0
      %v570 = vadd.f32 %v568, %v569
      %v571 = vsel %vm567, %v553, 0.0
      %v572 = vadd.f32 %v570, %v571
      %v573 = vsel %vm567, %v555, 0.0
      %v574 = vadd.f32 %v572, %v573
      %v575 = vsel %vm567, %v557, 0.0
      %v576 = vadd.f32 %v574, %v575
      %v577 = vsel %vm567, %v559, 0.0
      %v578 = vadd.f32 %v576, %v577
      %v579 = vsel %vm567, %v561, 0.0
      %v580 = vadd.f32 %v578, %v579
      %v581 = vsel %vm567, %v563, 0.0
      %v582 = vadd.f32 %v580, %v581
      %v583 = vsel %vm567, %v550, 0.0
      %v584 = vsel %vm567, %v552, 0.0
      %v585 = vadd.f32 %v583, %v584
      %v586 = vsel %vm567, %v554, 0.0
      %v587 = vadd.f32 %v585, %v586
      %v588 = vsel %vm567, %v556, 0.0
      %v589 = vadd.f32 %v587, %v588
      %v590 = vsel %vm567, %v558, 0.0
      %v591 = vadd.f32 %v589, %v590
      %v592 = vsel %vm567, %v560, 0.0
      %v593 = vadd.f32 %v591, %v592
      %v594 = vsel %vm567, %v562, 0.0
      %v595 = vadd.f32 %v593, %v594
      %v596 = vsel %vm567, %v564, 0.0
      %v597 = vadd.f32 %v595, %v596
      %v598 = vadd.f32 %v565, %v582
      %v599 = vadd.f32 %v566, %v597
      %600 = vst.msk [vmem:[#allocation7] sm:$0xff] %vm567, %v598
      %601 = vst.msk [vmem:[#allocation7 + $0x8] sm:$0xff] %vm567, %v599
    $region29: #{tpu_custom_call.1} parent=1 // pred_fallthru
      _
    // Predicated region
    $region30: #{tpu_custom_call.1} parent=1 // pred_check
      _
    $region31: #{tpu_custom_call.1} parent=1 // pred_check_branch
      %603 = sbr.rel (0) target = $region33
    $region32: #{tpu_custom_call.1} parent=1 // pred_region
      %s605 = ssub.s32 256, 256
      %606 = vsyncadd [#allocation4], %s605
      %s607 = sshll.u32 [#allocation7], 4
      %s608 = int_to_ptr.vmem [resolvable:$true] %s607
      %613 = dma.vmem_to_hbm [thread:$0]  %s608, 256, %s2, [#allocation4], 128, 128, 8
    $region33: #{tpu_custom_call.1} parent=1 // pred_fallthru
      _
    // Predicated region
    $region34: #{tpu_custom_call.1} parent=1 // pred_check
      _
    $region35: #{tpu_custom_call.1} parent=1 // pred_check_branch
      %615 = sbr.rel (0) target = $region37
    $region36: #{tpu_custom_call.1} parent=1 // pred_region
      %616 = dma.done [#allocation4], 256
    $region37: #{tpu_custom_call.1} parent=1 // pred_fallthru
      _
    %617 = vsyncpa [#allocation3], 1
    %618 = vsyncpa [#allocation6], 1
    %619 = vsyncpa [#allocation4], 1

</llo_original>
